<compile_context>
chip_gen: v6e
topology: v6e:2x2x1
jax: 0.10.0
libtpu: 0.0.40
codegen_flags: <defaults>
</compile_context>

<pallas_src>
import jax
import jax.numpy as jnp
from jax.experimental import pallas as pl
from jax.experimental.pallas import tpu as pltpu


def _attention_head_kernel(x_ref, w_ref, b_ref, o_ref):
    # x_ref: (Bblk, T, D) activations for this batch block (f32, real/unpadded D)
    # w_ref: (3, D, H)   stacked q/k/v weights, bf16, scale folded into slot 0
    # b_ref: (3, 1, H)   stacked q/k/v biases, f32, scale folded into slot 0
    # o_ref: (Bblk, T, H)
    bblk, t, d = x_ref.shape
    h = w_ref.shape[2]
    r = bblk * t

    # Merge batch rows so each projection matmul sees Bblk*T rows on the MXU.
    # (f32 reshape merges 8-aligned sublane groups; cast to bf16 only for the MXU operand.)
    x2d = x_ref[...].reshape(r, d).astype(jnp.bfloat16)                     # (R, D) bf16

    def proj(s):
        # bf16 x bf16 MXU pass, f32 accumulation; bias added in f32.
        y = jnp.dot(x2d, w_ref[s], preferred_element_type=jnp.float32) + b_ref[s]
        return y.reshape(bblk, t, h)                                        # (Bblk, T, H) f32

    q = proj(0).astype(jnp.bfloat16)   # 1/sqrt(head_size) already folded into w/b slot 0
    k = proj(1).astype(jnp.bfloat16)
    v = proj(2).astype(jnp.bfloat16)

    # q @ k^T per batch element, transpose consumed by the contraction (no XLU vxpose).
    att = jnp.einsum('bqh,bkh->bqk', q, k,
                     preferred_element_type=jnp.float32)                    # (Bblk, T, T) f32

    # Numerically-stable softmax in f32; EUP approximate reciprocal instead of a VPU divide.
    att = att - jnp.max(att, axis=-1, keepdims=True)
    p = jnp.exp(att)
    p = p * pl.reciprocal(jnp.sum(p, axis=-1, keepdims=True), approx=True)

    out = jnp.einsum('bqk,bkh->bqh', p.astype(jnp.bfloat16), v,
                     preferred_element_type=jnp.float32)                    # (Bblk, T, H) f32
    o_ref[...] = out.astype(o_ref.dtype)


def fuse_params(params, head_size):
    """One-time param prep: stack q/k/v weights/biases on a leading axis, fold the
    1/sqrt(head_size) attention scale into the q slot, cast weights to bf16."""
    scale = float(head_size) ** -0.5
    w = jnp.stack([params["wq"] * scale, params["wk"], params["wv"]], axis=0)   # (3, D, H)
    b = jnp.stack([params["bq"] * scale, params["bk"], params["bv"]], axis=0)   # (3, 1, H)
    return {"w": w.astype(jnp.bfloat16), "b": b.astype(jnp.float32)}


def attention_head_forward(x, fused, head_size, *, target_rows=256):
    """x: (B, T, D) f32; fused: {'w': (3, D, H) bf16, 'b': (3, 1, H) f32}."""
    B, T, D = x.shape
    w, b = fused["w"], fused["b"]
    H = w.shape[2]
    assert H == head_size

    # TODO(synk): mask padded key rows (logits -> -inf) if T ever needs alignment padding.
    assert T % 8 == 0, "sequence length must be sublane (8) aligned"
    # (bf16 packs 16 rows per vreg; T % 16 == 0 would pack fully, T = 8 is merely half-packed.)

    # Block as many batch elements per grid step as needed to fill the MXU M dimension
    # (aim Bblk*T ~ target_rows), keeping Bblk a divisor of B so every block is full.
    max_bblk = max(1, target_rows // T)
    bblk = 1
    for cand in range(1, B + 1):
        if B % cand == 0 and cand <= max_bblk:
            bblk = cand
    grid = (B // bblk,)

    itemsize = x.dtype.itemsize
    cost = pl.CostEstimate(
        flops=2 * B * T * D * 3 * H + 4 * B * T * T * H,
        transcendentals=B * T * T,
        bytes_accessed=(x.size * itemsize + w.size * w.dtype.itemsize
                        + b.size * b.dtype.itemsize + B * T * H * itemsize),
    )

    return pl.pallas_call(
        _attention_head_kernel,
        out_shape=jax.ShapeDtypeStruct((B, T, H), x.dtype),
        grid_spec=pltpu.PrefetchScalarGridSpec(
            num_scalar_prefetch=0,
            grid=grid,
            in_specs=[
                pl.BlockSpec((bblk, T, D), lambda i: (i, 0, 0)),   # x: real D, no wrapper pad
                pl.BlockSpec((3, D, H), lambda i: (0, 0, 0)),      # stacked qkv weight (grid-invariant)
                pl.BlockSpec((3, 1, H), lambda i: (0, 0, 0)),      # stacked qkv bias   (grid-invariant)
            ],
            out_specs=pl.BlockSpec((bblk, T, H), lambda i: (i, 0, 0)),
        ),
        compiler_params=pltpu.CompilerParams(
            # Batch-block axis is independent -> megacore-shardable on multi-TC chips.
            dimension_semantics=("parallel",),
            # TODO(synk): set vmem_limit_bytes with headroom once T grows beyond toy sizes.
        ),
        cost_estimate=cost,
    )(x, w, b)


def _reference_forward(x, params, head_size):
    q = x @ params["wq"] + params["bq"]
    k = x @ params["wk"] + params["bk"]
    v = x @ params["wv"] + params["bv"]
    att = (q @ jnp.swapaxes(k, 1, 2)) * (head_size ** -0.5)
    att = jax.nn.softmax(att, axis=-1)
    return att @ v


if __name__ == "__main__":
    # Small shapes consistent with the module's forward: (b, t, d) input.
    B, T, D = 2, 8, 32      # batch, seq len, n_embd
    H = 16                  # head_size
    P_DROPOUT = 0.1         # unused at inference (nn.Dropout is identity in eval mode)

    key = jax.random.PRNGKey(0)
    kx, kq, kk, kv, kbq, kbk, kbv = jax.random.split(key, 7)

    x = jax.random.normal(kx, (B, T, D), dtype=jnp.float32)

    # nn.Linear(n_embd, head_size): weight (H, D), bias (H,).
    # Stored here pre-transposed as (D, H); biases as (1, H) for clean broadcasting.
    init_scale = 1.0 / jnp.sqrt(jnp.float32(D))
    params = {
        "wq": jax.random.uniform(kq, (D, H), jnp.float32, -1.0, 1.0) * init_scale,
        "wk": jax.random.uniform(kk, (D, H), jnp.float32, -1.0, 1.0) * init_scale,
        "wv": jax.random.uniform(kv, (D, H), jnp.float32, -1.0, 1.0) * init_scale,
        "bq": jax.random.uniform(kbq, (1, H), jnp.float32, -1.0, 1.0) * init_scale,
        "bk": jax.random.uniform(kbk, (1, H), jnp.float32, -1.0, 1.0) * init_scale,
        "bv": jax.random.uniform(kbv, (1, H), jnp.float32, -1.0, 1.0) * init_scale,
    }

    fused = fuse_params(params, H)

    out = attention_head_forward(x, fused, H)
    out = jax.block_until_ready(out)

    ref = _reference_forward(x, params, H)
    assert out.shape == (B, T, H)
    # Tolerance covers bf16 MXU operands (f32 accumulation) and the EUP approximate
    # reciprocal in the softmax denominator.
    assert jnp.allclose(out, ref, atol=3e-2, rtol=3e-2), "mismatch vs JAX f32 reference"

    print("KERNEL_OK")
</pallas_src>

<mosaic_0001>
module attributes {stable_mosaic.version = 11 : i64} {
  func.func @_attention_head_kernel(%arg0: i32, %arg1: memref<2x8x32xf32, #tpu.memory_space<vmem>>, %arg2: memref<3x32x16xbf16, #tpu.memory_space<vmem>>, %arg3: memref<3x1x16xf32, #tpu.memory_space<vmem>>, %arg4: memref<2x8x16xf32, #tpu.memory_space<vmem>>) attributes {dimension_semantics = [#tpu.dimension_semantics<parallel>], iteration_bounds = array<i64: 1>, scalar_prefetch = 0 : i64, scratch_operands = 0 : i64, tpu.core_type = #tpu.core_type<tc>, window_params = [{transform_indices = @transform_0, window_bounds = array<i64: 2, 8, 32>}, {pipeline_mode = #tpu.pipeline_mode<synchronous>, transform_indices = @transform_1, window_bounds = array<i64: 3, 32, 16>}, {pipeline_mode = #tpu.pipeline_mode<synchronous>, transform_indices = @transform_2, window_bounds = array<i64: 3, 1, 16>}, {transform_indices = @transform_3, window_bounds = array<i64: 2, 8, 16>}]} {
    %c0 = arith.constant 0 : index
    %c0_0 = arith.constant 0 : index
    %c0_1 = arith.constant 0 : index
    %0 = vector.load %arg1[%c0, %c0_0, %c0_1] : memref<2x8x32xf32, #tpu.memory_space<vmem>>, vector<2x8x32xf32>
    %1 = vector.shape_cast %0 : vector<2x8x32xf32> to vector<16x32xf32>
    %2 = arith.truncf %1 : vector<16x32xf32> to vector<16x32xbf16>
    %c0_2 = arith.constant 0 : index
    %c0_3 = arith.constant 0 : index
    %c0_4 = arith.constant 0 : index
    %3 = vector.load %arg2[%c0_2, %c0_3, %c0_4] : memref<3x32x16xbf16, #tpu.memory_space<vmem>>, vector<1x32x16xbf16>
    %4 = vector.shape_cast %3 : vector<1x32x16xbf16> to vector<32x16xbf16>
    %cst = arith.constant dense<0.000000e+00> : vector<16x16xf32>
    %5 = tpu.matmul %2, %4, %cst {dimension_numbers = #tpu.dot_dimension_numbers<[1], [0], [0], [1], [0, 0, 1, 1], [], []>} : vector<16x32xbf16>, vector<32x16xbf16>, vector<16x16xf32> -> vector<16x16xf32>
    %c0_5 = arith.constant 0 : index
    %c0_6 = arith.constant 0 : index
    %c0_7 = arith.constant 0 : index
    %6 = vector.load %arg3[%c0_5, %c0_6, %c0_7] : memref<3x1x16xf32, #tpu.memory_space<vmem>>, vector<1x1x16xf32>
    %7 = vector.shape_cast %6 : vector<1x1x16xf32> to vector<1x16xf32>
    %8 = vector.broadcast %7 : vector<1x16xf32> to vector<16x16xf32>
    %9 = arith.addf %5, %8 : vector<16x16xf32>
    %10 = vector.shape_cast %9 : vector<16x16xf32> to vector<2x8x16xf32>
    %11 = arith.truncf %10 : vector<2x8x16xf32> to vector<2x8x16xbf16>
    %c1 = arith.constant 1 : index
    %c0_8 = arith.constant 0 : index
    %c0_9 = arith.constant 0 : index
    %12 = vector.load %arg2[%c1, %c0_8, %c0_9] : memref<3x32x16xbf16, #tpu.memory_space<vmem>>, vector<1x32x16xbf16>
    %13 = vector.shape_cast %12 : vector<1x32x16xbf16> to vector<32x16xbf16>
    %cst_10 = arith.constant dense<0.000000e+00> : vector<16x16xf32>
    %14 = tpu.matmul %2, %13, %cst_10 {dimension_numbers = #tpu.dot_dimension_numbers<[1], [0], [0], [1], [0, 0, 1, 1], [], []>} : vector<16x32xbf16>, vector<32x16xbf16>, vector<16x16xf32> -> vector<16x16xf32>
    %c1_11 = arith.constant 1 : index
    %c0_12 = arith.constant 0 : index
    %c0_13 = arith.constant 0 : index
    %15 = vector.load %arg3[%c1_11, %c0_12, %c0_13] : memref<3x1x16xf32, #tpu.memory_space<vmem>>, vector<1x1x16xf32>
    %16 = vector.shape_cast %15 : vector<1x1x16xf32> to vector<1x16xf32>
    %17 = vector.broadcast %16 : vector<1x16xf32> to vector<16x16xf32>
    %18 = arith.addf %14, %17 : vector<16x16xf32>
    %19 = vector.shape_cast %18 : vector<16x16xf32> to vector<2x8x16xf32>
    %20 = arith.truncf %19 : vector<2x8x16xf32> to vector<2x8x16xbf16>
    %c2 = arith.constant 2 : index
    %c0_14 = arith.constant 0 : index
    %c0_15 = arith.constant 0 : index
    %21 = vector.load %arg2[%c2, %c0_14, %c0_15] : memref<3x32x16xbf16, #tpu.memory_space<vmem>>, vector<1x32x16xbf16>
    %22 = vector.shape_cast %21 : vector<1x32x16xbf16> to vector<32x16xbf16>
    %cst_16 = arith.constant dense<0.000000e+00> : vector<16x16xf32>
    %23 = tpu.matmul %2, %22, %cst_16 {dimension_numbers = #tpu.dot_dimension_numbers<[1], [0], [0], [1], [0, 0, 1, 1], [], []>} : vector<16x32xbf16>, vector<32x16xbf16>, vector<16x16xf32> -> vector<16x16xf32>
    %c2_17 = arith.constant 2 : index
    %c0_18 = arith.constant 0 : index
    %c0_19 = arith.constant 0 : index
    %24 = vector.load %arg3[%c2_17, %c0_18, %c0_19] : memref<3x1x16xf32, #tpu.memory_space<vmem>>, vector<1x1x16xf32>
    %25 = vector.shape_cast %24 : vector<1x1x16xf32> to vector<1x16xf32>
    %26 = vector.broadcast %25 : vector<1x16xf32> to vector<16x16xf32>
    %27 = arith.addf %23, %26 : vector<16x16xf32>
    %28 = vector.shape_cast %27 : vector<16x16xf32> to vector<2x8x16xf32>
    %29 = arith.truncf %28 : vector<2x8x16xf32> to vector<2x8x16xbf16>
    "tpu.trace_start"() <{level = 10 : i32, message = "bqh,bkh->bqk"}> : () -> ()
    %cst_20 = arith.constant dense<0.000000e+00> : vector<2x8x8xf32>
    %30 = tpu.matmul %11, %20, %cst_20 {dimension_numbers = #tpu.dot_dimension_numbers<[2], [2], [1], [1], [0, 0, 0, 1, 1, 1], [0], [0]>} : vector<2x8x16xbf16>, vector<2x8x16xbf16>, vector<2x8x8xf32> -> vector<2x8x8xf32>
    "tpu.trace_stop"() : () -> ()
    %cst_21 = arith.constant dense<0xFF800000> : vector<2x8xf32>
    %31 = vector.multi_reduction <maximumf>, %30, %cst_21 [2] : vector<2x8x8xf32> to vector<2x8xf32>
    %32 = vector.shape_cast %31 : vector<2x8xf32> to vector<2x8x1xf32>
    %33 = vector.broadcast %32 : vector<2x8x1xf32> to vector<2x8x8xf32>
    %34 = arith.subf %30, %33 : vector<2x8x8xf32>
    %35 = math.exp %34 : vector<2x8x8xf32>
    %cst_22 = arith.constant dense<0.000000e+00> : vector<2x8xf32>
    %36 = vector.multi_reduction <add>, %35, %cst_22 [2] : vector<2x8x8xf32> to vector<2x8xf32>
    %37 = vector.shape_cast %36 : vector<2x8xf32> to vector<2x8x1xf32>
    %38 = tpu.reciprocal %37 {approx = true} : vector<2x8x1xf32> -> vector<2x8x1xf32>
    %39 = vector.broadcast %38 : vector<2x8x1xf32> to vector<2x8x8xf32>
    %40 = arith.mulf %35, %39 : vector<2x8x8xf32>
    %41 = arith.truncf %40 : vector<2x8x8xf32> to vector<2x8x8xbf16>
    "tpu.trace_start"() <{level = 10 : i32, message = "bqk,bkh->bqh"}> : () -> ()
    %cst_23 = arith.constant dense<0.000000e+00> : vector<2x8x16xf32>
    %42 = tpu.matmul %41, %29, %cst_23 {dimension_numbers = #tpu.dot_dimension_numbers<[2], [1], [1], [2], [0, 0, 0, 1, 1, 2], [0], [0]>} : vector<2x8x8xbf16>, vector<2x8x16xbf16>, vector<2x8x16xf32> -> vector<2x8x16xf32>
    "tpu.trace_stop"() : () -> ()
    %c0_24 = arith.constant 0 : index
    %c0_25 = arith.constant 0 : index
    %c0_26 = arith.constant 0 : index
    %43 = vector.load %arg4[%c0_24, %c0_25, %c0_26] : memref<2x8x16xf32, #tpu.memory_space<vmem>>, vector<2x8x16xf32>
    tpu.vector_store %arg4[%c0_24, %c0_25, %c0_26], %42 {strides = array<i32>} : memref<2x8x16xf32, #tpu.memory_space<vmem>>, vector<2x8x16xf32>,
    return
  }
  func.func @transform_0(%arg0: i32) -> (i32, i32, i32) {
    %c0_i32 = arith.constant 0 : i32
    %c0_i32_0 = arith.constant 0 : i32
    %c0_i32_1 = arith.constant 0 : i32
    return %arg0, %c0_i32, %c0_i32_0 : i32, i32, i32
  }
  func.func @transform_1(%arg0: i32) -> (i32, i32, i32) {
    %c0_i32 = arith.constant 0 : i32
    %c0_i32_0 = arith.constant 0 : i32
    %c0_i32_1 = arith.constant 0 : i32
    %c0_i32_2 = arith.constant 0 : i32
    return %c0_i32, %c0_i32_0, %c0_i32_1 : i32, i32, i32
  }
  func.func @transform_2(%arg0: i32) -> (i32, i32, i32) {
    %c0_i32 = arith.constant 0 : i32
    %c0_i32_0 = arith.constant 0 : i32
    %c0_i32_1 = arith.constant 0 : i32
    %c0_i32_2 = arith.constant 0 : i32
    return %c0_i32, %c0_i32_0, %c0_i32_1 : i32, i32, i32
  }
  func.func @transform_3(%arg0: i32) -> (i32, i32, i32) {
    %c0_i32 = arith.constant 0 : i32
    %c0_i32_0 = arith.constant 0 : i32
    %c0_i32_1 = arith.constant 0 : i32
    return %arg0, %c0_i32, %c0_i32_0 : i32, i32, i32
  }
}

</mosaic_0001>

<llo_original>
// kernel: tpu_custom_call.1
$region0: #{tpu_custom_call.1}
  #allocation0 [shape = 'u32[]', space=smem, size = 0x4, offset = 0x4, fixed_abs, tag = 'smem constant byte address 0x4 - core index']
  #allocation1 [shape = 'u32[144,128]{1,0:T(1,128)}', space=vmem, size = 0x12000, scoped, tag = 'internal scratch']
  %s0 = inlined_call_operand.vmem [shape: f32[2,8,32], index: 0, kind: input, shape index: {}]
  %s1 = inlined_call_operand.vmem [shape: bf16[3,32,16], index: 1, kind: input, shape index: {}]
  %s2 = inlined_call_operand.vmem [shape: f32[3,1,16], index: 2, kind: input, shape index: {}]
  %s3 = inlined_call_operand.hbm [shape: f32[2,8,16], index: 3, kind: output, shape index: {}]
  %s4 = sld [smem:[#allocation0]]
  $region22: #{tpu_custom_call.1} parent=0
    _
  %s6 = ssub.s32 1, %s4
  %s7 = scalar_select 0, %s6, %s4
  $region1: #{tpu_custom_call.1} parent=0
    #allocation2 [shape = 'u8[8192]{0}', space=vmem, size = 0x2000, scoped, tag = 'output window, operand 0, single buffered']
    #allocation3 [shape = 's32[1]{0}', space=sflag, size = 0x4, scoped, tag = 'scoped memory for tpu_custom_call.1']
    %8 = vsyncpa [#allocation3], 0
    // Predicated region
    $region2: #{tpu_custom_call.1} parent=1 // pred_check
      _
    $region3: #{tpu_custom_call.1} parent=1 // pred_check_branch
      %10 = sbr.rel (0) target = $region5
    $region4: #{tpu_custom_call.1} parent=1 // pred_region
      _
    $region5: #{tpu_custom_call.1} parent=1 // pred_fallthru
      _
    // Predicated region
    $region6: #{tpu_custom_call.1} parent=1 // pred_check
      _
    $region7: #{tpu_custom_call.1} parent=1 // pred_check_branch
      %12 = sbr.rel (0) target = $region9
    $region8: #{tpu_custom_call.1} parent=1 // pred_region
      _
    $region9: #{tpu_custom_call.1} parent=1 // pred_fallthru
      _
    // Predicated region
    $region10: #{tpu_custom_call.1} parent=1 // pred_check
      _
    $region11: #{tpu_custom_call.1} parent=1 // pred_check_branch
      %14 = sbr.rel (0) target = $region13
    $region12: #{tpu_custom_call.1} parent=1 // pred_region
      _
    $region13: #{tpu_custom_call.1} parent=1 // pred_fallthru
      _
    %v16 = vld [vmem:[%s0] sm:$0xff]
    %v17 = vld [vmem:[%s0 + $0x8] sm:$0xff]
    %v18 = vpack.c.bf16 %v17, %v16
    %v19 = vld [vmem:[%s1] sm:$0xf]
    %v20 = vld [vmem:[%s1 + $0x4] sm:$0xf]
    %v21 = vld [vmem:[%s1 + $0x8] sm:$0xf]
    %v22 = vld [vmem:[%s1 + $0xc] sm:$0xf]
    %v23 = vld [vmem:[%s2] sm:$0x1]
    %v25 = vlaneseq
    %v26 = vshrl.u32 %v25, 7
    %v27 = vsub.s32 0, %v26
    %v28 = vrot.slane %v23, %v27
    %v34 = vunpack.c.l.b16 %v19
    %v35 = vunpack.c.l.b16 %v20
    %v36 = vunpack.c.l.b16 %v21
    %v37 = vunpack.c.l.b16 %v22
    %v38 = vpack.c.b16 %v35, %v34
    %v39 = vpack.c.b16 %v37, %v36
    %vm42 = vcmask 261120
    %v44 = vsel %vm42, %v18, 0
    %46 = vmatprep.subr.bf16.mxu0 0
    %47 = vmatpush1.bf16.msra.mxu0 0
    %48 = vmatprep.subr.bf16.mxu0 0
    %49 = vmatpush1.bf16.msra.mxu0 0
    %50 = vmatprep.subr.bf16.mxu0 0
    %51 = vmatpush1.bf16.msra.mxu0 0
    %52 = vmatprep.subr.bf16.mxu0 0
    %53 = vmatpush1.bf16.msra.mxu0 0
    %54 = vmatprep.subr.bf16.mxu0 0
    %55 = vmatpush1.bf16.msra.mxu0 0
    %56 = vmatprep.subr.bf16.mxu0 0
    %57 = vmatpush1.bf16.msra.mxu0 0
    %58 = vmatprep.subr.bf16.mxu0 0
    %59 = vmatpush1.bf16.msra.mxu0 %v39
    %60 = vmatprep.subr.bf16.mxu0 0
    %61 = vmatpush1.bf16.msra.mxu0 %v38
    %62 = vmatprep.subr.bf16.mxu0 0
    %63 = vmatpush2.bf16.msra.mxu0 0
    %64 = vmatprep.subr.bf16.mxu0 0
    %65 = vmatpush2.bf16.msra.mxu0 0
    %66 = vmatprep.subr.bf16.mxu0 0
    %67 = vmatpush2.bf16.msra.mxu0 0
    %68 = vmatprep.subr.bf16.mxu0 0
    %69 = vmatpush2.bf16.msra.mxu0 0
    %70 = vmatprep.subr.bf16.mxu0 0
    %71 = vmatpush2.bf16.msra.mxu0 0
    %72 = vmatprep.subr.bf16.mxu0 0
    %73 = vmatpush2.bf16.msra.mxu0 0
    %74 = vmatprep.subr.bf16.mxu0 0
    %75 = vmatpush2.bf16.msra.mxu0 0
    %76 = vmatprep.subr.bf16.mxu0 0
    %77 = vmatpush2.bf16.msra.mxu0 0
    %78 = vmatprep.mubr.bf16.mxu0 0
    %79 = vmatmul.mubr.bf16.gmra.mxu0 %v44
    %v80 = vpop.f32.mrf.mxu0
    %v81 = vadd.f32 %v28, %v80
    %v82 = vpop.f32.mrf.mxu0
    %v83 = vpop.f32.mrf.mxu0
    %v84 = vadd.f32 %v28, %v83
    %v85 = vpop.f32.mrf.mxu0
    %86 = vdwg.mxu0
    %v87 = vpack.c.bf16 %v81, %v81
    %v88 = vpack.c.bf16 %v84, %v84
    %s89 = scalar_lea.vmem %s1, 16
    %v90 = vld [vmem:[%s89] sm:$0xf]
    %v91 = vld [vmem:[%s89 + $0x4] sm:$0xf]
    %v92 = vld [vmem:[%s89 + $0x8] sm:$0xf]
    %v93 = vld [vmem:[%s89 + $0xc] sm:$0xf]
    %s94 = scalar_lea.vmem %s2, 1
    %v95 = vld [vmem:[%s94] sm:$0x1]
    %v97 = vlaneseq
    %v98 = vshrl.u32 %v97, 7
    %v99 = vsub.s32 0, %v98
    %v100 = vrot.slane %v95, %v99
    %v106 = vunpack.c.l.b16 %v90
    %v107 = vunpack.c.l.b16 %v91
    %v108 = vunpack.c.l.b16 %v92
    %v109 = vunpack.c.l.b16 %v93
    %v110 = vpack.c.b16 %v107, %v106
    %v111 = vpack.c.b16 %v109, %v108
    %114 = vmatprep.subr.bf16.mxu0 0
    %115 = vmatpush1.bf16.msra.mxu0 0
    %116 = vmatprep.subr.bf16.mxu0 0
    %117 = vmatpush1.bf16.msra.mxu0 0
    %118 = vmatprep.subr.bf16.mxu0 0
    %119 = vmatpush1.bf16.msra.mxu0 0
    %120 = vmatprep.subr.bf16.mxu0 0
    %121 = vmatpush1.bf16.msra.mxu0 0
    %122 = vmatprep.subr.bf16.mxu0 0
    %123 = vmatpush1.bf16.msra.mxu0 0
    %124 = vmatprep.subr.bf16.mxu0 0
    %125 = vmatpush1.bf16.msra.mxu0 0
    %126 = vmatprep.subr.bf16.mxu0 0
    %127 = vmatpush1.bf16.msra.mxu0 %v111
    %128 = vmatprep.subr.bf16.mxu0 0
    %129 = vmatpush1.bf16.msra.mxu0 %v110
    %130 = vmatprep.subr.bf16.mxu0 0
    %131 = vmatpush2.bf16.msra.mxu0 0
    %132 = vmatprep.subr.bf16.mxu0 0
    %133 = vmatpush2.bf16.msra.mxu0 0
    %134 = vmatprep.subr.bf16.mxu0 0
    %135 = vmatpush2.bf16.msra.mxu0 0
    %136 = vmatprep.subr.bf16.mxu0 0
    %137 = vmatpush2.bf16.msra.mxu0 0
    %138 = vmatprep.subr.bf16.mxu0 0
    %139 = vmatpush2.bf16.msra.mxu0 0
    %140 = vmatprep.subr.bf16.mxu0 0
    %141 = vmatpush2.bf16.msra.mxu0 0
    %142 = vmatprep.subr.bf16.mxu0 0
    %143 = vmatpush2.bf16.msra.mxu0 0
    %144 = vmatprep.subr.bf16.mxu0 0
    %145 = vmatpush2.bf16.msra.mxu0 0
    %146 = vmatprep.mubr.bf16.mxu0 0
    %147 = vmatmul.mubr.bf16.gmra.mxu0 %v44
    %v148 = vpop.f32.mrf.mxu0
    %v149 = vadd.f32 %v100, %v148
    %v150 = vpop.f32.mrf.mxu0
    %v151 = vpop.f32.mrf.mxu0
    %v152 = vadd.f32 %v100, %v151
    %v153 = vpop.f32.mrf.mxu0
    %154 = vdwg.mxu0
    %v155 = vpack.c.bf16 %v149, %v149
    %v156 = vpack.c.bf16 %v152, %v152
    %s157 = scalar_lea.vmem %s1, 32
    %v158 = vld [vmem:[%s157] sm:$0xf]
    %v159 = vld [vmem:[%s157 + $0x4] sm:$0xf]
    %v160 = vld [vmem:[%s157 + $0x8] sm:$0xf]
    %v161 = vld [vmem:[%s157 + $0xc] sm:$0xf]
    %s162 = scalar_lea.vmem %s2, 2
    %v163 = vld [vmem:[%s162] sm:$0x1]
    %v165 = vlaneseq
    %v166 = vshrl.u32 %v165, 7
    %v167 = vsub.s32 0, %v166
    %v168 = vrot.slane %v163, %v167
    %v174 = vunpack.c.l.b16 %v158
    %v175 = vunpack.c.l.b16 %v159
    %v176 = vunpack.c.l.b16 %v160
    %v177 = vunpack.c.l.b16 %v161
    %v178 = vpack.c.b16 %v175, %v174
    %v179 = vpack.c.b16 %v177, %v176
    %182 = vmatprep.subr.bf16.mxu0 0
    %183 = vmatpush1.bf16.msra.mxu0 0
    %184 = vmatprep.subr.bf16.mxu0 0
    %185 = vmatpush1.bf16.msra.mxu0 0
    %186 = vmatprep.subr.bf16.mxu0 0
    %187 = vmatpush1.bf16.msra.mxu0 0
    %188 = vmatprep.subr.bf16.mxu0 0
    %189 = vmatpush1.bf16.msra.mxu0 0
    %190 = vmatprep.subr.bf16.mxu0 0
    %191 = vmatpush1.bf16.msra.mxu0 0
    %192 = vmatprep.subr.bf16.mxu0 0
    %193 = vmatpush1.bf16.msra.mxu0 0
    %194 = vmatprep.subr.bf16.mxu0 0
    %195 = vmatpush1.bf16.msra.mxu0 %v179
    %196 = vmatprep.subr.bf16.mxu0 0
    %197 = vmatpush1.bf16.msra.mxu0 %v178
    %198 = vmatprep.subr.bf16.mxu0 0
    %199 = vmatpush2.bf16.msra.mxu0 0
    %200 = vmatprep.subr.bf16.mxu0 0
    %201 = vmatpush2.bf16.msra.mxu0 0
    %202 = vmatprep.subr.bf16.mxu0 0
    %203 = vmatpush2.bf16.msra.mxu0 0
    %204 = vmatprep.subr.bf16.mxu0 0
    %205 = vmatpush2.bf16.msra.mxu0 0
    %206 = vmatprep.subr.bf16.mxu0 0
    %207 = vmatpush2.bf16.msra.mxu0 0
    %208 = vmatprep.subr.bf16.mxu0 0
    %209 = vmatpush2.bf16.msra.mxu0 0
    %210 = vmatprep.subr.bf16.mxu0 0
    %211 = vmatpush2.bf16.msra.mxu0 0
    %212 = vmatprep.subr.bf16.mxu0 0
    %213 = vmatpush2.bf16.msra.mxu0 0
    %214 = vmatprep.mubr.bf16.mxu0 0
    %215 = vmatmul.mubr.bf16.gmra.mxu0 %v44
    %v216 = vpop.f32.mrf.mxu0
    %v217 = vadd.f32 %v168, %v216
    %v218 = vpop.f32.mrf.mxu0
    %v219 = vpop.f32.mrf.mxu0
    %v220 = vadd.f32 %v168, %v219
    %v221 = vpop.f32.mrf.mxu0
    %222 = vdwg.mxu0
    %v223 = vpack.c.bf16 %v217, %v217
    %v224 = vpack.c.bf16 %v220, %v220
    %vm225 = vcmask 130048
    %v227 = vsel %vm225, %v87, 0
    %v230 = vsel %vm225, %v155, 0
    %232 = vmatprep.subr.bf16.mxu0 0
    %233 = vmatpush1.bf16.xpose.msra.mxu0 0
    %234 = vmatprep.subr.bf16.mxu0 0
    %235 = vmatpush1.bf16.xpose.msra.mxu0 0
    %236 = vmatprep.subr.bf16.mxu0 0
    %237 = vmatpush1.bf16.xpose.msra.mxu0 0
    %238 = vmatprep.subr.bf16.mxu0 0
    %239 = vmatpush1.bf16.xpose.msra.mxu0 0
    %240 = vmatprep.subr.bf16.mxu0 0
    %241 = vmatpush1.bf16.xpose.msra.mxu0 0
    %242 = vmatprep.subr.bf16.mxu0 0
    %243 = vmatpush1.bf16.xpose.msra.mxu0 0
    %244 = vmatprep.subr.bf16.mxu0 0
    %245 = vmatpush1.bf16.xpose.msra.mxu0 0
    %246 = vmatprep.subr.bf16.mxu0 0
    %247 = vmatpush1.bf16.xpose.msra.mxu0 %v230
    %248 = vmatprep.subr.bf16.mxu0 0
    %249 = vmatpush2.bf16.xpose.msra.mxu0 0
    %250 = vmatprep.subr.bf16.mxu0 0
    %251 = vmatpush2.bf16.xpose.msra.mxu0 0
    %252 = vmatprep.subr.bf16.mxu0 0
    %253 = vmatpush2.bf16.xpose.msra.mxu0 0
    %254 = vmatprep.subr.bf16.mxu0 0
    %255 = vmatpush2.bf16.xpose.msra.mxu0 0
    %256 = vmatprep.subr.bf16.mxu0 0
    %257 = vmatpush2.bf16.xpose.msra.mxu0 0
    %258 = vmatprep.subr.bf16.mxu0 0
    %259 = vmatpush2.bf16.xpose.msra.mxu0 0
    %260 = vmatprep.subr.bf16.mxu0 0
    %261 = vmatpush2.bf16.xpose.msra.mxu0 0
    %262 = vmatprep.subr.bf16.mxu0 0
    %263 = vmatpush2.bf16.xpose.msra.mxu0 0
    %264 = vmatprep.mubr.bf16.mxu0 0
    %265 = vmatmul.mubr.bf16.gmra.mxu0 %v227
    %v266 = vpop.f32.mrf.mxu0
    %v267 = vadd.f32 0.0, %v266
    %v268 = vpop.f32.mrf.mxu0
    %v269 = vpop.f32.mrf.mxu0
    %v270 = vpop.f32.mrf.mxu0
    %271 = vdwg.mxu0
    %v273 = vsel %vm225, %v88, 0
    %v276 = vsel %vm225, %v156, 0
    %278 = vmatprep.subr.bf16.mxu0 0
    %279 = vmatpush1.bf16.xpose.msra.mxu0 0
    %280 = vmatprep.subr.bf16.mxu0 0
    %281 = vmatpush1.bf16.xpose.msra.mxu0 0
    %282 = vmatprep.subr.bf16.mxu0 0
    %283 = vmatpush1.bf16.xpose.msra.mxu0 0
    %284 = vmatprep.subr.bf16.mxu0 0
    %285 = vmatpush1.bf16.xpose.msra.mxu0 0
    %286 = vmatprep.subr.bf16.mxu0 0
    %287 = vmatpush1.bf16.xpose.msra.mxu0 0
    %288 = vmatprep.subr.bf16.mxu0 0
    %289 = vmatpush1.bf16.xpose.msra.mxu0 0
    %290 = vmatprep.subr.bf16.mxu0 0
    %291 = vmatpush1.bf16.xpose.msra.mxu0 0
    %292 = vmatprep.subr.bf16.mxu0 0
    %293 = vmatpush1.bf16.xpose.msra.mxu0 %v276
    %294 = vmatprep.subr.bf16.mxu0 0
    %295 = vmatpush2.bf16.xpose.msra.mxu0 0
    %296 = vmatprep.subr.bf16.mxu0 0
    %297 = vmatpush2.bf16.xpose.msra.mxu0 0
    %298 = vmatprep.subr.bf16.mxu0 0
    %299 = vmatpush2.bf16.xpose.msra.mxu0 0
    %300 = vmatprep.subr.bf16.mxu0 0
    %301 = vmatpush2.bf16.xpose.msra.mxu0 0
    %302 = vmatprep.subr.bf16.mxu0 0
    %303 = vmatpush2.bf16.xpose.msra.mxu0 0
    %304 = vmatprep.subr.bf16.mxu0 0
    %305 = vmatpush2.bf16.xpose.msra.mxu0 0
    %306 = vmatprep.subr.bf16.mxu0 0
    %307 = vmatpush2.bf16.xpose.msra.mxu0 0
    %308 = vmatprep.subr.bf16.mxu0 0
    %309 = vmatpush2.bf16.xpose.msra.mxu0 0
    %310 = vmatprep.mubr.bf16.mxu0 0
    %311 = vmatmul.mubr.bf16.gmra.mxu0 %v273
    %v312 = vpop.f32.mrf.mxu0
    %v313 = vadd.f32 0.0, %v312
    %v314 = vpop.f32.mrf.mxu0
    %v315 = vpop.f32.mrf.mxu0
    %v316 = vpop.f32.mrf.mxu0
    %317 = vdwg.mxu0
    %vm318 = vcmask 64512
    %v319 = vsel %vm318, %v267, -inf
    %320 = vmax.xlane.f32.xlu0 %v319
    %v321 = vpop.xlane.xlu0 %320
    %v322 = vsel %vm318, %v313, -inf
    %323 = vmax.xlane.f32.xlu0 %v322
    %v324 = vpop.xlane.xlu0 %323
    %v325 = vsub.f32 %v267, %v321
    %v326 = vsub.f32 %v313, %v324
    %v327 = vmul.f32 %v325, 1.442695
    %v328 = vpow.pop %v327
    %v329 = vmul.f32 %v326, 1.442695
    %v330 = vpow.pop %v329
    %v331 = vsel %vm318, %v328, 0.0
    %332 = vadd.xlane.f32.xlu0 %v331
    %v333 = vpop.xlane.xlu0 %332
    %v334 = vsel %vm318, %v330, 0.0
    %335 = vadd.xlane.f32.xlu0 %v334
    %v336 = vpop.xlane.xlu0 %335
    %v337 = vrcp.pop %v333
    %v338 = vrcp.pop %v336
    %v339 = vmul.f32 %v328, %v337
    %v340 = vmul.f32 %v330, %v338
    %v341 = vpack.c.bf16 %v339, %v339
    %v342 = vpack.c.bf16 %v340, %v340
    %v344 = vsel %vm318, %v341, 0
    %vm346 = vcmask 1043456
    %v348 = vsel %vm346, %v223, 0
    %350 = vmatprep.subr.bf16.mxu0 0
    %351 = vmatpush1.bf16.msra.mxu0 0
    %352 = vmatprep.subr.bf16.mxu0 0
    %353 = vmatpush1.bf16.msra.mxu0 0
    %354 = vmatprep.subr.bf16.mxu0 0
    %355 = vmatpush1.bf16.msra.mxu0 0
    %356 = vmatprep.subr.bf16.mxu0 0
    %357 = vmatpush1.bf16.msra.mxu0 0
    %358 = vmatprep.subr.bf16.mxu0 0
    %359 = vmatpush1.bf16.msra.mxu0 0
    %360 = vmatprep.subr.bf16.mxu0 0
    %361 = vmatpush1.bf16.msra.mxu0 0
    %362 = vmatprep.subr.bf16.mxu0 0
    %363 = vmatpush1.bf16.msra.mxu0 0
    %364 = vmatprep.subr.bf16.mxu0 0
    %365 = vmatpush1.bf16.msra.mxu0 %v348
    %366 = vmatprep.subr.bf16.mxu0 0
    %367 = vmatpush2.bf16.msra.mxu0 0
    %368 = vmatprep.subr.bf16.mxu0 0
    %369 = vmatpush2.bf16.msra.mxu0 0
    %370 = vmatprep.subr.bf16.mxu0 0
    %371 = vmatpush2.bf16.msra.mxu0 0
    %372 = vmatprep.subr.bf16.mxu0 0
    %373 = vmatpush2.bf16.msra.mxu0 0
    %374 = vmatprep.subr.bf16.mxu0 0
    %375 = vmatpush2.bf16.msra.mxu0 0
    %376 = vmatprep.subr.bf16.mxu0 0
    %377 = vmatpush2.bf16.msra.mxu0 0
    %378 = vmatprep.subr.bf16.mxu0 0
    %379 = vmatpush2.bf16.msra.mxu0 0
    %380 = vmatprep.subr.bf16.mxu0 0
    %381 = vmatpush2.bf16.msra.mxu0 0
    %382 = vmatprep.mubr.bf16.mxu0 0
    %383 = vmatmul.mubr.bf16.gmra.mxu0 %v344
    %v384 = vpop.f32.mrf.mxu0
    %v385 = vadd.f32 0.0, %v384
    %v386 = vpop.f32.mrf.mxu0
    %v387 = vpop.f32.mrf.mxu0
    %v388 = vpop.f32.mrf.mxu0
    %389 = vdwg.mxu0
    %v391 = vsel %vm318, %v342, 0
    %v394 = vsel %vm346, %v224, 0
    %396 = vmatprep.subr.bf16.mxu0 0
    %397 = vmatpush1.bf16.msra.mxu0 0
    %398 = vmatprep.subr.bf16.mxu0 0
    %399 = vmatpush1.bf16.msra.mxu0 0
    %400 = vmatprep.subr.bf16.mxu0 0
    %401 = vmatpush1.bf16.msra.mxu0 0
    %402 = vmatprep.subr.bf16.mxu0 0
    %403 = vmatpush1.bf16.msra.mxu0 0
    %404 = vmatprep.subr.bf16.mxu0 0
    %405 = vmatpush1.bf16.msra.mxu0 0
    %406 = vmatprep.subr.bf16.mxu0 0
    %407 = vmatpush1.bf16.msra.mxu0 0
    %408 = vmatprep.subr.bf16.mxu0 0
    %409 = vmatpush1.bf16.msra.mxu0 0
    %410 = vmatprep.subr.bf16.mxu0 0
    %411 = vmatpush1.bf16.msra.mxu0 %v394
    %412 = vmatprep.subr.bf16.mxu0 0
    %413 = vmatpush2.bf16.msra.mxu0 0
    %414 = vmatprep.subr.bf16.mxu0 0
    %415 = vmatpush2.bf16.msra.mxu0 0
    %416 = vmatprep.subr.bf16.mxu0 0
    %417 = vmatpush2.bf16.msra.mxu0 0
    %418 = vmatprep.subr.bf16.mxu0 0
    %419 = vmatpush2.bf16.msra.mxu0 0
    %420 = vmatprep.subr.bf16.mxu0 0
    %421 = vmatpush2.bf16.msra.mxu0 0
    %422 = vmatprep.subr.bf16.mxu0 0
    %423 = vmatpush2.bf16.msra.mxu0 0
    %424 = vmatprep.subr.bf16.mxu0 0
    %425 = vmatpush2.bf16.msra.mxu0 0
    %426 = vmatprep.subr.bf16.mxu0 0
    %427 = vmatpush2.bf16.msra.mxu0 0
    %428 = vmatprep.mubr.bf16.mxu0 0
    %429 = vmatmul.mubr.bf16.gmra.mxu0 %v391
    %v430 = vpop.f32.mrf.mxu0
    %v431 = vadd.f32 0.0, %v430
    %v432 = vpop.f32.mrf.mxu0
    %v433 = vpop.f32.mrf.mxu0
    %v434 = vpop.f32.mrf.mxu0
    %435 = vdwg.mxu0
    %436 = vst.msk [vmem:[#allocation2] sm:$0xff] %vm225, %v385
    %437 = vst.msk [vmem:[#allocation2 + $0x8] sm:$0xff] %vm225, %v431
    // Predicated region
    $region14: #{tpu_custom_call.1} parent=1 // pred_check
      _
    $region15: #{tpu_custom_call.1} parent=1 // pred_check_branch
      %439 = sbr.rel (0) target = $region17
    $region16: #{tpu_custom_call.1} parent=1 // pred_region
      %s441 = ssub.s32 256, 256
      %442 = vsyncadd [#allocation3], %s441
      %s443 = sshll.u32 [#allocation2], 4
      %s444 = int_to_ptr.vmem [resolvable:$true] %s443
      %449 = dma.vmem_to_hbm [thread:$0]  %s444, 256, %s3, [#allocation3], 128, 128, 8
    $region17: #{tpu_custom_call.1} parent=1 // pred_fallthru
      _
    // Predicated region
    $region18: #{tpu_custom_call.1} parent=1 // pred_check
      _
    $region19: #{tpu_custom_call.1} parent=1 // pred_check_branch
      %451 = sbr.rel (0) target = $region21
    $region20: #{tpu_custom_call.1} parent=1 // pred_region
      %452 = dma.done [#allocation3], 256
    $region21: #{tpu_custom_call.1} parent=1 // pred_fallthru
      _
    %453 = vsyncpa [#allocation3], 1

</llo_original>
